<compile_context>
chip_gen: v6e
topology: v6e:2x2x1
jax: 0.10.0
libtpu: 0.0.40
codegen_flags: <defaults>
</compile_context>

<pallas_src>
import functools

import jax
import jax.numpy as jnp
from jax.experimental import pallas as pl
from jax.experimental.pallas import tpu as pltpu


def _fused_block_kernel(x_ref, w_ref, bias_ref, out_ref, pad_a, pad_b, *, H, WC):
    """One batch element: relu(L3(L2(L1(x))) + x), all layers fused in VMEM.

    x_ref:    (1, H, WC)      lane-dense activation slab
    w_ref:    (9, WC, WC)     banded weight matrices (3 layers x 3 row-offsets)
    bias_ref: (3, WC)         BN bias, tiled along W
    pad_a/b:  (H+2, WC)       H-padded ping-pong scratch
    """
    dt = pad_a.dtype
    zero_row = jnp.zeros((1, WC), dt)

    # Zero only the 1-row top/bottom borders; interiors are fully overwritten
    # and the W-padding is baked into the banded weight matrices, so there are
    # no lane borders to clear.  Not gated on program_id (megacore-safe).
    pad_a[pl.ds(0, 1), :] = zero_row
    pad_a[pl.ds(H + 1, 1), :] = zero_row
    pad_b[pl.ds(0, 1), :] = zero_row
    pad_b[pl.ds(H + 1, 1), :] = zero_row

    # Input image into pad_a's interior rows (single lane-dense store).
    pad_a[pl.ds(1, H), :] = x_ref[0]

    biases = bias_ref[...].astype(jnp.float32)           # (3, WC)

    def conv_bn_relu(src_ref, layer):
        # 3 banded MXU matmuls (one per row offset dh); each one contracts all
        # three dw taps of that row at once.  f32 accumulation.
        acc = jnp.zeros((H, WC), jnp.float32)
        for dh in range(3):
            acc += jnp.dot(src_ref[pl.ds(dh, H), :],      # (H, WC)
                           w_ref[layer * 3 + dh],         # (WC, WC)
                           preferred_element_type=jnp.float32)
        # BN scale already folded into the weights: only bias + ReLU here.
        return jnp.maximum(acc + biases[layer:layer + 1, :], 0.0)

    # layer1: pad_a -> pad_b
    y = conv_bn_relu(pad_a, 0)
    pad_b[pl.ds(1, H), :] = y.astype(dt)

    # layer2: pad_b -> pad_a
    y = conv_bn_relu(pad_b, 1)
    pad_a[pl.ds(1, H), :] = y.astype(dt)

    # layer3 + residual add + final ReLU; re-read x here to keep its live
    # range short (no value held across the nine matmuls).
    y = conv_bn_relu(pad_a, 2)
    out = jnp.maximum(y + x_ref[0].astype(jnp.float32), 0.0)
    out_ref[0] = out.astype(out_ref.dtype)


def define_module_forward(x, params):
    """Fused residual-block forward.

    x: (N, H, W, C) NHWC.
    params: list of 3 tuples (w(3,3,Cin,Cout), scale(C), bias(C)) with the BN
            inference scale/bias already folded from running statistics.
    """
    N, H, W, C = x.shape
    WC = W * C
    (w1, s1, b1), (w2, s2, b2), (w3, s3, b3) = params
    assert w1.shape == (3, 3, C, C), "residual add requires inplanes == planes"

    # ---- parameter-side prep (free: done once, outside the kernel) ---------
    def banded_mats(w, scale):
        # Fold BN scale into the conv weights (output-channel scaling).
        w_s = w * scale[None, None, None, :]              # (3,3,Cin,Cout)
        rows = []
        for dh in range(3):
            # sum_dw kron(S_dw, w_s[dh, dw]) with S_dw[a, w] = 1 iff a == w+dw-1:
            # the dw shift and the zero padding in W are encoded in the band.
            m = jnp.zeros((WC, WC), x.dtype)
            for dw in range(3):
                m = m + jnp.kron(jnp.eye(W, k=1 - dw, dtype=x.dtype),
                                 w_s[dh, dw].astype(x.dtype))
            rows.append(m)
        return jnp.stack(rows)                            # (3, WC, WC)

    # TODO(synk): on v6e/v7x cast these (and the activations) to bf16 for the
    #             MXU; kept f32 here so the toy test matches the f32 reference.
    w_mats = jnp.concatenate(
        [banded_mats(w1, s1), banded_mats(w2, s2), banded_mats(w3, s3)],
        axis=0)                                           # (9, WC, WC)
    biases = jnp.stack([jnp.tile(b1, W), jnp.tile(b2, W), jnp.tile(b3, W)])  # (3, WC)

    # Lane-dense activation layout for the kernel.
    x2d = x.reshape(N, H, WC)

    kernel = functools.partial(_fused_block_kernel, H=H, WC=WC)

    flops = 2 * 3 * 3 * N * H * WC * WC                   # 9 banded matmuls / image
    bytes_accessed = (2 * N * H * WC + 9 * WC * WC + 3 * WC) * x.dtype.itemsize

    out2d = pl.pallas_call(
        kernel,
        out_shape=jax.ShapeDtypeStruct((N, H, WC), x.dtype),
        grid_spec=pltpu.PrefetchScalarGridSpec(
            num_scalar_prefetch=0,
            grid=(N,),
            in_specs=[
                pl.BlockSpec((1, H, WC), lambda n: (n, 0, 0)),
                pl.BlockSpec((9, WC, WC), lambda n: (0, 0, 0)),
                pl.BlockSpec((3, WC), lambda n: (0, 0)),
            ],
            out_specs=pl.BlockSpec((1, H, WC), lambda n: (n, 0, 0)),
            scratch_shapes=[pltpu.VMEM((H + 2, WC), x.dtype),
                            pltpu.VMEM((H + 2, WC), x.dtype)],
        ),
        compiler_params=pltpu.CompilerParams(dimension_semantics=("parallel",)),
        cost_estimate=pl.CostEstimate(flops=flops, transcendentals=0,
                                      bytes_accessed=bytes_accessed),
    )(x2d, w_mats, biases)

    return out2d.reshape(N, H, W, C)


# ---------------------------------------------------------------------------
# Pure-JAX reference (correctness check only).
def _ref_layer(x, w, scale, bias):
    y = jax.lax.conv_general_dilated(
        x, w, window_strides=(1, 1), padding="SAME",
        dimension_numbers=("NHWC", "HWIO", "NHWC"))
    return jnp.maximum(y * scale + bias, 0.0)


def _ref_forward(x, params):
    (w1, s1, b1), (w2, s2, b2), (w3, s3, b3) = params
    out = _ref_layer(x, w1, s1, b1)
    out = _ref_layer(out, w2, s2, b2)
    out = _ref_layer(out, w3, s3, b3)
    return jnp.maximum(out + x, 0.0)


if __name__ == "__main__":
    # Small shapes: batch=2, inplanes=planes=8, spatial=16x16 (NHWC), W*C = 128.
    N, H, W, C = 2, 16, 16, 8
    eps = 1e-5

    key = jax.random.PRNGKey(0)
    kx, k1, k2, k3 = jax.random.split(key, 4)

    x = jax.random.normal(kx, (N, H, W, C), dtype=jnp.float32)

    def make_layer(k, cin, cout):
        w = 0.1 * jax.random.normal(k, (3, 3, cin, cout), dtype=jnp.float32)
        # BN at deterministic init: gamma=1, beta=0, running_mean=0, running_var=1.
        gamma = jnp.ones((cout,), jnp.float32)
        beta = jnp.zeros((cout,), jnp.float32)
        r_mean = jnp.zeros((cout,), jnp.float32)
        r_var = jnp.ones((cout,), jnp.float32)
        scale = gamma / jnp.sqrt(r_var + eps)
        bias = beta - r_mean * scale
        return (w, scale, bias)

    params = [make_layer(k1, C, C), make_layer(k2, C, C), make_layer(k3, C, C)]

    out = define_module_forward(x, params)
    out = jax.block_until_ready(out)

    ref = _ref_forward(x, params)
    assert out.shape == (N, H, W, C)
    err = jnp.max(jnp.abs(out - ref))
    assert jnp.allclose(out, ref, atol=2e-4, rtol=2e-4), f"max abs err = {err}"

    print("KERNEL_OK")
</pallas_src>

<mosaic_0001>
module attributes {stable_mosaic.version = 11 : i64} {
  func.func @_fused_block_kernel(%arg0: i32, %arg1: memref<1x16x128xf32, #tpu.memory_space<vmem>>, %arg2: memref<9x128x128xf32, #tpu.memory_space<vmem>>, %arg3: memref<3x128xf32, #tpu.memory_space<vmem>>, %arg4: memref<1x16x128xf32, #tpu.memory_space<vmem>>, %arg5: memref<18x128xf32, #tpu.memory_space<vmem>>, %arg6: memref<18x128xf32, #tpu.memory_space<vmem>>) attributes {dimension_semantics = [#tpu.dimension_semantics<parallel>], iteration_bounds = array<i64: 2>, scalar_prefetch = 0 : i64, scratch_operands = 2 : i64, tpu.core_type = #tpu.core_type<tc>, window_params = [{transform_indices = @transform_0, window_bounds = array<i64: 1, 16, 128>}, {pipeline_mode = #tpu.pipeline_mode<synchronous>, transform_indices = @transform_1, window_bounds = array<i64: 9, 128, 128>}, {pipeline_mode = #tpu.pipeline_mode<synchronous>, transform_indices = @transform_2, window_bounds = array<i64: 3, 128>}, {transform_indices = @transform_3, window_bounds = array<i64: 1, 16, 128>}]} {
    %cst = arith.constant 0.000000e+00 : f32
    %0 = vector.broadcast %cst : f32 to vector<1x128xf32>
    %c0 = arith.constant 0 : index
    %c0_0 = arith.constant 0 : index
    %1 = vector.load %arg5[%c0, %c0_0] : memref<18x128xf32, #tpu.memory_space<vmem>>, vector<1x128xf32>
    tpu.vector_store %arg5[%c0, %c0_0], %0 {strides = array<i32>} : memref<18x128xf32, #tpu.memory_space<vmem>>, vector<1x128xf32>,
    %c17 = arith.constant 17 : index
    %c0_1 = arith.constant 0 : index
    %2 = vector.load %arg5[%c17, %c0_1] : memref<18x128xf32, #tpu.memory_space<vmem>>, vector<1x128xf32>
    tpu.vector_store %arg5[%c17, %c0_1], %0 {strides = array<i32>} : memref<18x128xf32, #tpu.memory_space<vmem>>, vector<1x128xf32>,
    %c0_2 = arith.constant 0 : index
    %c0_3 = arith.constant 0 : index
    %3 = vector.load %arg6[%c0_2, %c0_3] : memref<18x128xf32, #tpu.memory_space<vmem>>, vector<1x128xf32>
    tpu.vector_store %arg6[%c0_2, %c0_3], %0 {strides = array<i32>} : memref<18x128xf32, #tpu.memory_space<vmem>>, vector<1x128xf32>,
    %c17_4 = arith.constant 17 : index
    %c0_5 = arith.constant 0 : index
    %4 = vector.load %arg6[%c17_4, %c0_5] : memref<18x128xf32, #tpu.memory_space<vmem>>, vector<1x128xf32>
    tpu.vector_store %arg6[%c17_4, %c0_5], %0 {strides = array<i32>} : memref<18x128xf32, #tpu.memory_space<vmem>>, vector<1x128xf32>,
    %c0_6 = arith.constant 0 : index
    %c0_7 = arith.constant 0 : index
    %c0_8 = arith.constant 0 : index
    %5 = vector.load %arg1[%c0_6, %c0_7, %c0_8] : memref<1x16x128xf32, #tpu.memory_space<vmem>>, vector<1x16x128xf32>
    %6 = vector.shape_cast %5 : vector<1x16x128xf32> to vector<16x128xf32>
    %c1 = arith.constant 1 : index
    %c0_9 = arith.constant 0 : index
    %7 = vector.load %arg5[%c1, %c0_9] : memref<18x128xf32, #tpu.memory_space<vmem>>, vector<16x128xf32>
    tpu.vector_store %arg5[%c1, %c0_9], %6 {strides = array<i32>} : memref<18x128xf32, #tpu.memory_space<vmem>>, vector<16x128xf32>,
    %c0_10 = arith.constant 0 : index
    %c0_11 = arith.constant 0 : index
    %8 = vector.load %arg3[%c0_10, %c0_11] : memref<3x128xf32, #tpu.memory_space<vmem>>, vector<3x128xf32>
    %cst_12 = arith.constant 0.000000e+00 : f32
    %9 = vector.broadcast %cst_12 : f32 to vector<16x128xf32>
    %c0_13 = arith.constant 0 : index
    %c0_14 = arith.constant 0 : index
    %10 = vector.load %arg5[%c0_13, %c0_14] : memref<18x128xf32, #tpu.memory_space<vmem>>, vector<16x128xf32>
    %c0_15 = arith.constant 0 : index
    %c0_16 = arith.constant 0 : index
    %c0_17 = arith.constant 0 : index
    %11 = vector.load %arg2[%c0_15, %c0_16, %c0_17] : memref<9x128x128xf32, #tpu.memory_space<vmem>>, vector<1x128x128xf32>
    %12 = vector.shape_cast %11 : vector<1x128x128xf32> to vector<128x128xf32>
    %cst_18 = arith.constant dense<0.000000e+00> : vector<16x128xf32>
    %13 = tpu.matmul %10, %12, %cst_18 {dimension_numbers = #tpu.dot_dimension_numbers<[1], [0], [0], [1], [0, 0, 1, 1], [], []>} : vector<16x128xf32>, vector<128x128xf32>, vector<16x128xf32> -> vector<16x128xf32>
    %14 = arith.addf %9, %13 : vector<16x128xf32>
    %c1_19 = arith.constant 1 : index
    %c0_20 = arith.constant 0 : index
    %15 = vector.load %arg5[%c1_19, %c0_20] : memref<18x128xf32, #tpu.memory_space<vmem>>, vector<16x128xf32>
    %c1_21 = arith.constant 1 : index
    %c0_22 = arith.constant 0 : index
    %c0_23 = arith.constant 0 : index
    %16 = vector.load %arg2[%c1_21, %c0_22, %c0_23] : memref<9x128x128xf32, #tpu.memory_space<vmem>>, vector<1x128x128xf32>
    %17 = vector.shape_cast %16 : vector<1x128x128xf32> to vector<128x128xf32>
    %cst_24 = arith.constant dense<0.000000e+00> : vector<16x128xf32>
    %18 = tpu.matmul %15, %17, %cst_24 {dimension_numbers = #tpu.dot_dimension_numbers<[1], [0], [0], [1], [0, 0, 1, 1], [], []>} : vector<16x128xf32>, vector<128x128xf32>, vector<16x128xf32> -> vector<16x128xf32>
    %19 = arith.addf %14, %18 : vector<16x128xf32>
    %c2 = arith.constant 2 : index
    %c0_25 = arith.constant 0 : index
    %20 = vector.load %arg5[%c2, %c0_25] : memref<18x128xf32, #tpu.memory_space<vmem>>, vector<16x128xf32>
    %c2_26 = arith.constant 2 : index
    %c0_27 = arith.constant 0 : index
    %c0_28 = arith.constant 0 : index
    %21 = vector.load %arg2[%c2_26, %c0_27, %c0_28] : memref<9x128x128xf32, #tpu.memory_space<vmem>>, vector<1x128x128xf32>
    %22 = vector.shape_cast %21 : vector<1x128x128xf32> to vector<128x128xf32>
    %cst_29 = arith.constant dense<0.000000e+00> : vector<16x128xf32>
    %23 = tpu.matmul %20, %22, %cst_29 {dimension_numbers = #tpu.dot_dimension_numbers<[1], [0], [0], [1], [0, 0, 1, 1], [], []>} : vector<16x128xf32>, vector<128x128xf32>, vector<16x128xf32> -> vector<16x128xf32>
    %24 = arith.addf %19, %23 : vector<16x128xf32>
    %25 = vector.extract_strided_slice %8 {offsets = [0, 0], sizes = [1, 128], strides = [1, 1]} : vector<3x128xf32> to vector<1x128xf32>
    %26 = vector.broadcast %25 : vector<1x128xf32> to vector<16x128xf32>
    %27 = arith.addf %24, %26 : vector<16x128xf32>
    %cst_30 = arith.constant 0.000000e+00 : f32
    %28 = vector.broadcast %cst_30 : f32 to vector<16x128xf32>
    %29 = arith.maximumf %27, %28 : vector<16x128xf32>
    %c1_31 = arith.constant 1 : index
    %c0_32 = arith.constant 0 : index
    %30 = vector.load %arg6[%c1_31, %c0_32] : memref<18x128xf32, #tpu.memory_space<vmem>>, vector<16x128xf32>
    tpu.vector_store %arg6[%c1_31, %c0_32], %29 {strides = array<i32>} : memref<18x128xf32, #tpu.memory_space<vmem>>, vector<16x128xf32>,
    %cst_33 = arith.constant 0.000000e+00 : f32
    %31 = vector.broadcast %cst_33 : f32 to vector<16x128xf32>
    %c0_34 = arith.constant 0 : index
    %c0_35 = arith.constant 0 : index
    %32 = vector.load %arg6[%c0_34, %c0_35] : memref<18x128xf32, #tpu.memory_space<vmem>>, vector<16x128xf32>
    %c3 = arith.constant 3 : index
    %c0_36 = arith.constant 0 : index
    %c0_37 = arith.constant 0 : index
    %33 = vector.load %arg2[%c3, %c0_36, %c0_37] : memref<9x128x128xf32, #tpu.memory_space<vmem>>, vector<1x128x128xf32>
    %34 = vector.shape_cast %33 : vector<1x128x128xf32> to vector<128x128xf32>
    %cst_38 = arith.constant dense<0.000000e+00> : vector<16x128xf32>
    %35 = tpu.matmul %32, %34, %cst_38 {dimension_numbers = #tpu.dot_dimension_numbers<[1], [0], [0], [1], [0, 0, 1, 1], [], []>} : vector<16x128xf32>, vector<128x128xf32>, vector<16x128xf32> -> vector<16x128xf32>
    %36 = arith.addf %31, %35 : vector<16x128xf32>
    %c1_39 = arith.constant 1 : index
    %c0_40 = arith.constant 0 : index
    %37 = vector.load %arg6[%c1_39, %c0_40] : memref<18x128xf32, #tpu.memory_space<vmem>>, vector<16x128xf32>
    %c4 = arith.constant 4 : index
    %c0_41 = arith.constant 0 : index
    %c0_42 = arith.constant 0 : index
    %38 = vector.load %arg2[%c4, %c0_41, %c0_42] : memref<9x128x128xf32, #tpu.memory_space<vmem>>, vector<1x128x128xf32>
    %39 = vector.shape_cast %38 : vector<1x128x128xf32> to vector<128x128xf32>
    %cst_43 = arith.constant dense<0.000000e+00> : vector<16x128xf32>
    %40 = tpu.matmul %37, %39, %cst_43 {dimension_numbers = #tpu.dot_dimension_numbers<[1], [0], [0], [1], [0, 0, 1, 1], [], []>} : vector<16x128xf32>, vector<128x128xf32>, vector<16x128xf32> -> vector<16x128xf32>
    %41 = arith.addf %36, %40 : vector<16x128xf32>
    %c2_44 = arith.constant 2 : index
    %c0_45 = arith.constant 0 : index
    %42 = vector.load %arg6[%c2_44, %c0_45] : memref<18x128xf32, #tpu.memory_space<vmem>>, vector<16x128xf32>
    %c5 = arith.constant 5 : index
    %c0_46 = arith.constant 0 : index
    %c0_47 = arith.constant 0 : index
    %43 = vector.load %arg2[%c5, %c0_46, %c0_47] : memref<9x128x128xf32, #tpu.memory_space<vmem>>, vector<1x128x128xf32>
    %44 = vector.shape_cast %43 : vector<1x128x128xf32> to vector<128x128xf32>
    %cst_48 = arith.constant dense<0.000000e+00> : vector<16x128xf32>
    %45 = tpu.matmul %42, %44, %cst_48 {dimension_numbers = #tpu.dot_dimension_numbers<[1], [0], [0], [1], [0, 0, 1, 1], [], []>} : vector<16x128xf32>, vector<128x128xf32>, vector<16x128xf32> -> vector<16x128xf32>
    %46 = arith.addf %41, %45 : vector<16x128xf32>
    %47 = vector.extract_strided_slice %8 {offsets = [1, 0], sizes = [1, 128], strides = [1, 1]} : vector<3x128xf32> to vector<1x128xf32>
    %48 = vector.broadcast %47 : vector<1x128xf32> to vector<16x128xf32>
    %49 = arith.addf %46, %48 : vector<16x128xf32>
    %cst_49 = arith.constant 0.000000e+00 : f32
    %50 = vector.broadcast %cst_49 : f32 to vector<16x128xf32>
    %51 = arith.maximumf %49, %50 : vector<16x128xf32>
    %c1_50 = arith.constant 1 : index
    %c0_51 = arith.constant 0 : index
    %52 = vector.load %arg5[%c1_50, %c0_51] : memref<18x128xf32, #tpu.memory_space<vmem>>, vector<16x128xf32>
    tpu.vector_store %arg5[%c1_50, %c0_51], %51 {strides = array<i32>} : memref<18x128xf32, #tpu.memory_space<vmem>>, vector<16x128xf32>,
    %cst_52 = arith.constant 0.000000e+00 : f32
    %53 = vector.broadcast %cst_52 : f32 to vector<16x128xf32>
    %c0_53 = arith.constant 0 : index
    %c0_54 = arith.constant 0 : index
    %54 = vector.load %arg5[%c0_53, %c0_54] : memref<18x128xf32, #tpu.memory_space<vmem>>, vector<16x128xf32>
    %c6 = arith.constant 6 : index
    %c0_55 = arith.constant 0 : index
    %c0_56 = arith.constant 0 : index
    %55 = vector.load %arg2[%c6, %c0_55, %c0_56] : memref<9x128x128xf32, #tpu.memory_space<vmem>>, vector<1x128x128xf32>
    %56 = vector.shape_cast %55 : vector<1x128x128xf32> to vector<128x128xf32>
    %cst_57 = arith.constant dense<0.000000e+00> : vector<16x128xf32>
    %57 = tpu.matmul %54, %56, %cst_57 {dimension_numbers = #tpu.dot_dimension_numbers<[1], [0], [0], [1], [0, 0, 1, 1], [], []>} : vector<16x128xf32>, vector<128x128xf32>, vector<16x128xf32> -> vector<16x128xf32>
    %58 = arith.addf %53, %57 : vector<16x128xf32>
    %c1_58 = arith.constant 1 : index
    %c0_59 = arith.constant 0 : index
    %59 = vector.load %arg5[%c1_58, %c0_59] : memref<18x128xf32, #tpu.memory_space<vmem>>, vector<16x128xf32>
    %c7 = arith.constant 7 : index
    %c0_60 = arith.constant 0 : index
    %c0_61 = arith.constant 0 : index
    %60 = vector.load %arg2[%c7, %c0_60, %c0_61] : memref<9x128x128xf32, #tpu.memory_space<vmem>>, vector<1x128x128xf32>
    %61 = vector.shape_cast %60 : vector<1x128x128xf32> to vector<128x128xf32>
    %cst_62 = arith.constant dense<0.000000e+00> : vector<16x128xf32>
    %62 = tpu.matmul %59, %61, %cst_62 {dimension_numbers = #tpu.dot_dimension_numbers<[1], [0], [0], [1], [0, 0, 1, 1], [], []>} : vector<16x128xf32>, vector<128x128xf32>, vector<16x128xf32> -> vector<16x128xf32>
    %63 = arith.addf %58, %62 : vector<16x128xf32>
    %c2_63 = arith.constant 2 : index
    %c0_64 = arith.constant 0 : index
    %64 = vector.load %arg5[%c2_63, %c0_64] : memref<18x128xf32, #tpu.memory_space<vmem>>, vector<16x128xf32>
    %c8 = arith.constant 8 : index
    %c0_65 = arith.constant 0 : index
    %c0_66 = arith.constant 0 : index
    %65 = vector.load %arg2[%c8, %c0_65, %c0_66] : memref<9x128x128xf32, #tpu.memory_space<vmem>>, vector<1x128x128xf32>
    %66 = vector.shape_cast %65 : vector<1x128x128xf32> to vector<128x128xf32>
    %cst_67 = arith.constant dense<0.000000e+00> : vector<16x128xf32>
    %67 = tpu.matmul %64, %66, %cst_67 {dimension_numbers = #tpu.dot_dimension_numbers<[1], [0], [0], [1], [0, 0, 1, 1], [], []>} : vector<16x128xf32>, vector<128x128xf32>, vector<16x128xf32> -> vector<16x128xf32>
    %68 = arith.addf %63, %67 : vector<16x128xf32>
    %69 = vector.extract_strided_slice %8 {offsets = [2, 0], sizes = [1, 128], strides = [1, 1]} : vector<3x128xf32> to vector<1x128xf32>
    %70 = vector.broadcast %69 : vector<1x128xf32> to vector<16x128xf32>
    %71 = arith.addf %68, %70 : vector<16x128xf32>
    %cst_68 = arith.constant 0.000000e+00 : f32
    %72 = vector.broadcast %cst_68 : f32 to vector<16x128xf32>
    %73 = arith.maximumf %71, %72 : vector<16x128xf32>
    %c0_69 = arith.constant 0 : index
    %c0_70 = arith.constant 0 : index
    %c0_71 = arith.constant 0 : index
    %74 = vector.load %arg1[%c0_69, %c0_70, %c0_71] : memref<1x16x128xf32, #tpu.memory_space<vmem>>, vector<1x16x128xf32>
    %75 = vector.shape_cast %74 : vector<1x16x128xf32> to vector<16x128xf32>
    %76 = arith.addf %73, %75 : vector<16x128xf32>
    %cst_72 = arith.constant 0.000000e+00 : f32
    %77 = vector.broadcast %cst_72 : f32 to vector<16x128xf32>
    %78 = arith.maximumf %76, %77 : vector<16x128xf32>
    %c0_73 = arith.constant 0 : index
    %c0_74 = arith.constant 0 : index
    %c0_75 = arith.constant 0 : index
    %79 = vector.load %arg4[%c0_73, %c0_74, %c0_75] : memref<1x16x128xf32, #tpu.memory_space<vmem>>, vector<1x16x128xf32>
    %80 = vector.shape_cast %79 : vector<1x16x128xf32> to vector<16x128xf32>
    %81 = vector.shape_cast %78 : vector<16x128xf32> to vector<1x16x128xf32>
    tpu.vector_store %arg4[%c0_73, %c0_74, %c0_75], %81 {strides = array<i32>} : memref<1x16x128xf32, #tpu.memory_space<vmem>>, vector<1x16x128xf32>,
    return
  }
  func.func @transform_0(%arg0: i32) -> (i32, i32, i32) {
    %c0_i32 = arith.constant 0 : i32
    %c0_i32_0 = arith.constant 0 : i32
    %c0_i32_1 = arith.constant 0 : i32
    return %arg0, %c0_i32, %c0_i32_0 : i32, i32, i32
  }
  func.func @transform_1(%arg0: i32) -> (i32, i32, i32) {
    %c0_i32 = arith.constant 0 : i32
    %c0_i32_0 = arith.constant 0 : i32
    %c0_i32_1 = arith.constant 0 : i32
    %c0_i32_2 = arith.constant 0 : i32
    return %c0_i32, %c0_i32_0, %c0_i32_1 : i32, i32, i32
  }
  func.func @transform_2(%arg0: i32) -> (i32, i32) {
    %c0_i32 = arith.constant 0 : i32
    %c0_i32_0 = arith.constant 0 : i32
    %c0_i32_1 = arith.constant 0 : i32
    return %c0_i32, %c0_i32_0 : i32, i32
  }
  func.func @transform_3(%arg0: i32) -> (i32, i32, i32) {
    %c0_i32 = arith.constant 0 : i32
    %c0_i32_0 = arith.constant 0 : i32
    %c0_i32_1 = arith.constant 0 : i32
    return %arg0, %c0_i32, %c0_i32_0 : i32, i32, i32
  }
}

</mosaic_0001>

<llo_original>
// kernel: tpu_custom_call.1
$region0: #{tpu_custom_call.1}
  #allocation0 [shape = 'u32[]', space=smem, size = 0x4, offset = 0x4, fixed_abs, tag = 'smem constant byte address 0x4 - core index']
  #allocation1 [shape = 'u32[144,128]{1,0:T(1,128)}', space=vmem, size = 0x12000, scoped, tag = 'internal scratch']
  #allocation2 [shape = 'f32[18,128]{1,0:T(8,128)}', space=vmem, size = 0x3000, scoped, tag = 'scratch operand']
  #allocation3 [shape = 'f32[18,128]{1,0:T(8,128)}', space=vmem, size = 0x3000, scoped, tag = 'scratch operand']
  %s0 = inlined_call_operand.hbm [shape: f32[2,16,128], index: 0, kind: input, shape index: {}]
  %s1 = inlined_call_operand.hbm [shape: f32[9,128,128], index: 1, kind: input, shape index: {}]
  %s2 = inlined_call_operand.hbm [shape: f32[3,128], index: 2, kind: input, shape index: {}]
  %s3 = inlined_call_operand.hbm [shape: f32[2,16,128], index: 3, kind: output, shape index: {}]
  %s4 = sld [smem:[#allocation0]]
  $region57: #{tpu_custom_call.1} parent=0
    _
  %s6 = ssub.s32 1, %s4
  %s7 = scalar_select 0, %s6, %s4
  $region1: #{tpu_custom_call.1} parent=0
    #allocation4 [shape = 'u8[16384]{0}', space=vmem, size = 0x4000, scoped, tag = 'input window, operand 0']
    #allocation5 [shape = 's32[2]{0}', space=sflag, size = 0x8, scoped, tag = 'scoped memory for tpu_custom_call.1']
    #allocation6 [shape = 's32[2]{0}', space=sflag, size = 0x8, scoped, tag = 'scoped memory for tpu_custom_call.1']
    #allocation7 [shape = 'u8[589824]{0}', space=vmem, size = 0x90000, scoped, tag = 'input window, operand 1, single buffered']
    #allocation8 [shape = 's32[1]{0}', space=sflag, size = 0x4, scoped, tag = 'scoped memory for tpu_custom_call.1']
    #allocation9 [shape = 'u8[2048]{0}', space=vmem, size = 0x800, scoped, tag = 'input window, operand 2, single buffered']
    #allocation10 [shape = 'u8[16384]{0}', space=vmem, size = 0x4000, scoped, tag = 'output window, operand 0']
    %8 = vsyncpa [#allocation5], 0
    %s9 = scalar_lea.sflag [#allocation5], 1
    %10 = vsyncpa %s9, 0
    %11 = vsyncpa [#allocation8], 0
    %12 = vsyncpa [#allocation6], 0
    %s13 = scalar_lea.sflag [#allocation6], 1
    %14 = vsyncpa %s13, 0
    loop: start=0, step=1, limit=4
    $region2: #{tpu_custom_call.1} parent=1 // loop_pre_header
      _
    $region3: #{tpu_custom_call.1} parent=1 // loop_header
      %s16 = sphi 0, %s20
      %p17 = scmp.ge.s32.totalorder %s16, 4
      %s26 = sphi 0, %s28
      %s29 = sphi 0, %s26
      %s30 = sphi 0, %s29
      %s46 = sphi 0, %s30
      %s50 = sphi 0, %s50
      %s52 = sphi 0, %s50
      %s53 = sphi 0, %s52
      %s67 = sphi 0, %s53
      %s71 = sphi 0, %s71
      %s73 = sphi 0, %s71
      %s74 = sphi 0, %s73
      %s88 = sphi 0, %s74
      %s94 = sphi 0, %s96
      %s97 = sphi 0, %s94
      %s98 = sphi 0, %s97
      %s114 = sphi 0, %s98
    $region4: #{tpu_custom_call.1} parent=1 // loop_header_branch
      %19 = sbr.rel (%p17) target = $region8
    $region5: #{tpu_custom_call.1} parent=1 // loop_body
      %s21 = ssub.s32 %s16, 1
      %s22 = ssub.s32 %s16, 2
      %s23 = sadd.s32 %s16, 1
      %s24 = ssub.s32 %s16, %s23
      %p25 = scmp.eq.s32.totalorder %s24, 0
      %s27 = sadd.s32 %s26, 1
      %s28 = scalar_select %p25, %s26, %s27
      %p31 = pneg %p25
      %p32 = scmp.eq.s32.totalorder %s16, 1
      %p33 = por %p31, %p32
      %p34 = scmp.ne.s32.totalorder %s26, %s29
      %p35 = scmp.eq.s32.totalorder %s16, 0
      %p36 = por %p34, %p35
      %p37 = scmp.ne.s32.totalorder %s26, %s29
      %p38 = scmp.eq.s32.totalorder %s21, 1
      %p39 = por %p37, %p38
      %p40 = scmp.ne.s32.totalorder %s29, %s30
      %p41 = scmp.eq.s32.totalorder %s21, 0
      %p42 = por %p40, %p41
      %p43 = scmp.ne.s32.totalorder %s29, %s30
      %p44 = scmp.eq.s32.totalorder %s22, 1
      %p45 = por %p43, %p44
      %p47 = scmp.ne.s32.totalorder %s30, %s46
      %p48 = scmp.eq.s32.totalorder %s22, 0
      %p49 = por %p47, %p48
      %s51 = sadd.s32 %s50, 1
      %p54 = scmp.eq.s32.totalorder %s16, 1
      %p55 = scmp.ne.s32.totalorder %s50, %s52
      %p56 = scmp.eq.s32.totalorder %s16, 0
      %p57 = por %p55, %p56
      %p58 = scmp.ne.s32.totalorder %s50, %s52
      %p59 = scmp.eq.s32.totalorder %s21, 1
      %p60 = por %p58, %p59
      %p61 = scmp.ne.s32.totalorder %s52, %s53
      %p62 = scmp.eq.s32.totalorder %s21, 0
      %p63 = por %p61, %p62
      %p64 = scmp.ne.s32.totalorder %s52, %s53
      %p65 = scmp.eq.s32.totalorder %s22, 1
      %p66 = por %p64, %p65
      %p68 = scmp.ne.s32.totalorder %s53, %s67
      %p69 = scmp.eq.s32.totalorder %s22, 0
      %p70 = por %p68, %p69
      %s72 = sadd.s32 %s71, 1
      %p75 = scmp.eq.s32.totalorder %s16, 1
      %p76 = scmp.ne.s32.totalorder %s71, %s73
      %p77 = scmp.eq.s32.totalorder %s16, 0
      %p78 = por %p76, %p77
      %p79 = scmp.ne.s32.totalorder %s71, %s73
      %p80 = scmp.eq.s32.totalorder %s21, 1
      %p81 = por %p79, %p80
      %p82 = scmp.ne.s32.totalorder %s73, %s74
      %p83 = scmp.eq.s32.totalorder %s21, 0
      %p84 = por %p82, %p83
      %p85 = scmp.ne.s32.totalorder %s73, %s74
      %p86 = scmp.eq.s32.totalorder %s22, 1
      %p87 = por %p85, %p86
      %p89 = scmp.ne.s32.totalorder %s74, %s88
      %p90 = scmp.eq.s32.totalorder %s22, 0
      %p91 = por %p89, %p90
      %s92 = ssub.s32 %s16, %s23
      %p93 = scmp.eq.s32.totalorder %s92, 0
      %s95 = sadd.s32 %s94, 1
      %s96 = scalar_select %p93, %s94, %s95
      %p99 = pneg %p93
      %p100 = scmp.eq.s32.totalorder %s16, 1
      %p101 = por %p99, %p100
      %p102 = scmp.ne.s32.totalorder %s94, %s97
      %p103 = scmp.eq.s32.totalorder %s16, 0
      %p104 = por %p102, %p103
      %p105 = scmp.ne.s32.totalorder %s94, %s97
      %p106 = scmp.eq.s32.totalorder %s21, 1
      %p107 = por %p105, %p106
      %p108 = scmp.ne.s32.totalorder %s97, %s98
      %p109 = scmp.eq.s32.totalorder %s21, 0
      %p110 = por %p108, %p109
      %p111 = scmp.ne.s32.totalorder %s97, %s98
      %p112 = scmp.eq.s32.totalorder %s22, 1
      %p113 = por %p111, %p112
      %p115 = scmp.ne.s32.totalorder %s98, %s114
      %p116 = scmp.eq.s32.totalorder %s22, 0
      %p117 = por %p115, %p116
      %p118 = scmp.le.s32.totalorder 1, %s16
      %p119 = scmp.lt.s32.totalorder %s16, 3
      %p120 = pnand %p118, %p119
      %p121 = pneg %p120
      // Predicated region
      $region9: #{tpu_custom_call.1} parent=5 // pred_check
        _
      $region10: #{tpu_custom_call.1} parent=5 // pred_check_branch
        %123 = sbr.rel (%p120) target = $region12
      $region11: #{tpu_custom_call.1} parent=5 // pred_region
        %s124 = ssub.s32 %s16, 1
        // Predicated region
        $region13: #{tpu_custom_call.1} parent=11 // pred_check
          %p125 = pneg %p63
        $region14: #{tpu_custom_call.1} parent=11 // pred_check_branch
          %127 = sbr.rel (%p125) target = $region16
        $region15: #{tpu_custom_call.1} parent=11 // pred_region
          %s129 = ssub.s32 18432, 18432
          %130 = vsyncadd [#allocation8], %s129
          %s131 = sshll.u32 [#allocation7], 4
          %s132 = int_to_ptr.vmem [resolvable:$true] %s131
          %137 = dma.hbm_to_vmem [thread:$0]  %s1, 18432, %s132, [#allocation8], 128, 128, 8
        $region16: #{tpu_custom_call.1} parent=11 // pred_fallthru
          _
        // Predicated region
        $region17: #{tpu_custom_call.1} parent=11 // pred_check
          %p138 = pneg %p84
        $region18: #{tpu_custom_call.1} parent=11 // pred_check_branch
          %140 = sbr.rel (%p138) target = $region20
        $region19: #{tpu_custom_call.1} parent=11 // pred_region
          %s142 = ssub.s32 64, 64
          %143 = vsyncadd [#allocation8], %s142
          %s145 = sshll.u32 [#allocation9], 4
          %s146 = int_to_ptr.vmem [resolvable:$true] %s145
          %148 = dma.hbm_to_vmem [thread:$0]  %s2, 64, %s146, [#allocation8]
        $region20: #{tpu_custom_call.1} parent=11 // pred_fallthru
          _
      $region12: #{tpu_custom_call.1} parent=5 // pred_fallthru
        _
      %p149 = scmp.lt.s32.totalorder %s16, 2
      // Predicated region
      $region21: #{tpu_custom_call.1} parent=5 // pred_check
        %p150 = pneg %p149
      $region22: #{tpu_custom_call.1} parent=5 // pred_check_branch
        %152 = sbr.rel (%p150) target = $region24
      $region23: #{tpu_custom_call.1} parent=5 // pred_region
        // Predicated region
        $region25: #{tpu_custom_call.1} parent=23 // pred_check
          %p153 = pneg %p36
        $region26: #{tpu_custom_call.1} parent=23 // pred_check_branch
          %155 = sbr.rel (%p153) target = $region28
        $region27: #{tpu_custom_call.1} parent=23 // pred_region
          %s156 = sand.u32 %s26, 1
          %s157 = scalar_lea.sflag [#allocation5], %s156
          %s158 = sand.u32 %s26, 1
          %s159 = smul.addr %s158, 16
          %s160 = scalar_lea.vmem [#allocation4], %s159
          %s162 = ssub.s32 256, 256
          %163 = vsyncadd %s157, %s162
          %s164 = smul.addr %s16, 2
          %s165 = smul.addr %s164, 128
          %s166 = scalar_lea.hbm %s0, %s165
          %s167 = sshll.u32 %s160, 4
          %s168 = int_to_ptr.vmem [resolvable:$true] %s167
          %173 = dma.hbm_to_vmem [thread:$0]  %s166, 256, %s168, %s157, 128, 128, 8
        $region28: #{tpu_custom_call.1} parent=23 // pred_fallthru
          _
      $region24: #{tpu_custom_call.1} parent=5 // pred_fallthru
        _
      %p174 = scmp.le.s32.totalorder 1, %s16
      %p175 = scmp.lt.s32.totalorder %s16, 3
      %p176 = pnand %p174, %p175
      %p177 = pneg %p176
      // Predicated region
      $region29: #{tpu_custom_call.1} parent=5 // pred_check
        _
      $region30: #{tpu_custom_call.1} parent=5 // pred_check_branch
        %179 = sbr.rel (%p176) target = $region32
      $region31: #{tpu_custom_call.1} parent=5 // pred_region
        %s180 = ssub.s32 %s16, 1
        %s181 = sand.u32 %s29, 1
        %s182 = scalar_lea.sflag [#allocation5], %s181
        %s183 = sand.u32 %s29, 1
        %s184 = smul.addr %s183, 16
        %s185 = scalar_lea.vmem [#allocation4], %s184
        // Predicated region
        $region33: #{tpu_custom_call.1} parent=31 // pred_check
          %p186 = pneg %p42
        $region34: #{tpu_custom_call.1} parent=31 // pred_check_branch
          %188 = sbr.rel (%p186) target = $region36
        $region35: #{tpu_custom_call.1} parent=31 // pred_region
          %189 = dma.done %s182, 256
        $region36: #{tpu_custom_call.1} parent=31 // pred_fallthru
          _
        // Predicated region
        $region37: #{tpu_custom_call.1} parent=31 // pred_check
          %p190 = pneg %p63
        $region38: #{tpu_custom_call.1} parent=31 // pred_check_branch
          %192 = sbr.rel (%p190) target = $region40
        $region39: #{tpu_custom_call.1} parent=31 // pred_region
          %193 = dma.done [#allocation8], 18432
        $region40: #{tpu_custom_call.1} parent=31 // pred_fallthru
          _
        // Predicated region
        $region41: #{tpu_custom_call.1} parent=31 // pred_check
          %p194 = pneg %p84
        $region42: #{tpu_custom_call.1} parent=31 // pred_check_branch
          %196 = sbr.rel (%p194) target = $region44
        $region43: #{tpu_custom_call.1} parent=31 // pred_region
          %197 = dma.done [#allocation8], 64
        $region44: #{tpu_custom_call.1} parent=31 // pred_fallthru
          _
        %s198 = sand.u32 %s29, 1
        %s199 = scalar_lea.sflag [#allocation5], %s198
        %s200 = sand.u32 %s29, 1
        %s201 = smul.addr %s200, 16
        %s202 = scalar_lea.vmem [#allocation4], %s201
        %p203 = pneg %p42
        %p204 = pneg %p39
        %p205 = pneg %p63
        %p206 = pneg %p60
        %p207 = pneg %p84
        %p208 = pneg %p81
        %p209 = pneg %p110
        %p210 = pneg %p107
        %s211 = sand.u32 %s97, 1
        %s212 = scalar_lea.sflag [#allocation6], %s211
        %s213 = sand.u32 %s97, 1
        %s214 = smul.addr %s213, 16
        %s215 = scalar_lea.vmem [#allocation10], %s214
        %216 = vst [vmem:[#allocation2] sm:$0x1] 0.0
        %217 = vst [vmem:[#allocation2 + $0x11] sm:$0x1] 0.0
        %218 = vst [vmem:[#allocation3] sm:$0x1] 0.0
        %219 = vst [vmem:[#allocation3 + $0x11] sm:$0x1] 0.0
        %v220 = vld [vmem:[%s185] sm:$0xff]
        %v221 = vld [vmem:[%s185 + $0x8] sm:$0xff]
        %222 = vst [vmem:[#allocation2 + $0x1] sm:$0xff] %v220
        %223 = vst [vmem:[#allocation2 + $0x9] sm:$0xff] %v221
        %v224 = vld [vmem:[#allocation9] sm:$0x7]
        %v225 = vld [vmem:[#allocation2] sm:$0xff]
        %v226 = vld [vmem:[#allocation2 + $0x8] sm:$0xff]
        %v227 = vld [vmem:[#allocation7] sm:$0xff]
        %v228 = vld [vmem:[#allocation7 + $0x8] sm:$0xff]
        %v229 = vld [vmem:[#allocation7 + $0x10] sm:$0xff]
        %v230 = vld [vmem:[#allocation7 + $0x18] sm:$0xff]
        %v231 = vld [vmem:[#allocation7 + $0x20] sm:$0xff]
        %v232 = vld [vmem:[#allocation7 + $0x28] sm:$0xff]
        %v233 = vld [vmem:[#allocation7 + $0x30] sm:$0xff]
        %v234 = vld [vmem:[#allocation7 + $0x38] sm:$0xff]
        %v235 = vld [vmem:[#allocation7 + $0x40] sm:$0xff]
        %v236 = vld [vmem:[#allocation7 + $0x48] sm:$0xff]
        %v237 = vld [vmem:[#allocation7 + $0x50] sm:$0xff]
        %v238 = vld [vmem:[#allocation7 + $0x58] sm:$0xff]
        %v239 = vld [vmem:[#allocation7 + $0x60] sm:$0xff]
        %v240 = vld [vmem:[#allocation7 + $0x68] sm:$0xff]
        %v241 = vld [vmem:[#allocation7 + $0x70] sm:$0xff]
        %v242 = vld [vmem:[#allocation7 + $0x78] sm:$0xff]
        %v243 = vld [vmem:[#allocation2 + $0x1] sm:$0xff]
        %v244 = vld [vmem:[#allocation2 + $0x9] sm:$0xff]
        %s245 = scalar_lea.vmem [#allocation7], 128
        %v246 = vld [vmem:[%s245] sm:$0xff]
        %v247 = vld [vmem:[%s245 + $0x8] sm:$0xff]
        %v248 = vld [vmem:[%s245 + $0x10] sm:$0xff]
        %v249 = vld [vmem:[%s245 + $0x18] sm:$0xff]
        %v250 = vld [vmem:[%s245 + $0x20] sm:$0xff]
        %v251 = vld [vmem:[%s245 + $0x28] sm:$0xff]
        %v252 = vld [vmem:[%s245 + $0x30] sm:$0xff]
        %v253 = vld [vmem:[%s245 + $0x38] sm:$0xff]
        %v254 = vld [vmem:[%s245 + $0x40] sm:$0xff]
        %v255 = vld [vmem:[%s245 + $0x48] sm:$0xff]
        %v256 = vld [vmem:[%s245 + $0x50] sm:$0xff]
        %v257 = vld [vmem:[%s245 + $0x58] sm:$0xff]
        %v258 = vld [vmem:[%s245 + $0x60] sm:$0xff]
        %v259 = vld [vmem:[%s245 + $0x68] sm:$0xff]
        %v260 = vld [vmem:[%s245 + $0x70] sm:$0xff]
        %v261 = vld [vmem:[%s245 + $0x78] sm:$0xff]
        %262 = vmatprep.subr.mxu0 0.0
        %263 = vmatpush1.msra.mxu0 %v261
        %264 = vmatprep.subr.mxu0 0.0
        %265 = vmatpush1.msra.mxu0 %v260
        %266 = vmatprep.subr.mxu0 0.0
        %267 = vmatpush1.msra.mxu0 %v259
        %268 = vmatprep.subr.mxu0 0.0
        %269 = vmatpush1.msra.mxu0 %v258
        %270 = vmatprep.subr.mxu0 0.0
        %271 = vmatpush1.msra.mxu0 %v257
        %272 = vmatprep.subr.mxu0 0.0
        %273 = vmatpush1.msra.mxu0 %v256
        %274 = vmatprep.subr.mxu0 0.0
        %275 = vmatpush1.msra.mxu0 %v255
        %276 = vmatprep.subr.mxu0 0.0
        %277 = vmatpush1.msra.mxu0 %v254
        %278 = vmatprep.subr.mxu0 0.0
        %279 = vmatpush1.msra.mxu0 %v253
        %280 = vmatprep.subr.mxu0 0.0
        %281 = vmatpush1.msra.mxu0 %v252
        %282 = vmatprep.subr.mxu0 0.0
        %283 = vmatpush1.msra.mxu0 %v251
        %284 = vmatprep.subr.mxu0 0.0
        %285 = vmatpush1.msra.mxu0 %v250
        %286 = vmatprep.subr.mxu0 0.0
        %287 = vmatpush1.msra.mxu0 %v249
        %288 = vmatprep.subr.mxu0 0.0
        %289 = vmatpush1.msra.mxu0 %v248
        %290 = vmatprep.subr.mxu0 0.0
        %291 = vmatpush1.msra.mxu0 %v247
        %292 = vmatprep.subr.mxu0 0.0
        %293 = vmatpush1.msra.mxu0 %v246
        %294 = vmatprep.subr.mxu0 0.0
        %295 = vmatpush2.msra.mxu0 0.0
        %296 = vmatprep.subr.mxu0 0.0
        %297 = vmatpush2.msra.mxu0 0.0
        %298 = vmatprep.subr.mxu0 0.0
        %299 = vmatpush2.msra.mxu0 0.0
        %300 = vmatprep.subr.mxu0 0.0
        %301 = vmatpush2.msra.mxu0 0.0
        %302 = vmatprep.subr.mxu0 0.0
        %303 = vmatpush2.msra.mxu0 0.0
        %304 = vmatprep.subr.mxu0 0.0
        %305 = vmatpush2.msra.mxu0 0.0
        %306 = vmatprep.subr.mxu0 0.0
        %307 = vmatpush2.msra.mxu0 0.0
        %308 = vmatprep.subr.mxu0 0.0
        %309 = vmatpush2.msra.mxu0 0.0
        %310 = vmatprep.subr.mxu0 0.0
        %311 = vmatpush2.msra.mxu0 0.0
        %312 = vmatprep.subr.mxu0 0.0
        %313 = vmatpush2.msra.mxu0 0.0
        %314 = vmatprep.subr.mxu0 0.0
        %315 = vmatpush2.msra.mxu0 0.0
        %316 = vmatprep.subr.mxu0 0.0
        %317 = vmatpush2.msra.mxu0 0.0
        %318 = vmatprep.subr.mxu0 0.0
        %319 = vmatpush2.msra.mxu0 0.0
        %320 = vmatprep.subr.mxu0 0.0
        %321 = vmatpush2.msra.mxu0 0.0
        %322 = vmatprep.subr.mxu0 0.0
        %323 = vmatpush2.msra.mxu0 0.0
        %324 = vmatprep.subr.mxu0 0.0
        %325 = vmatpush2.msra.mxu0 0.0
        %326 = vmatprep.mubr.f32.mxu0 0.0
        %327 = vmatmul.mubr.f32.gmra.mxu0 %v243
        %v328 = vpop.f32.mrf.mxu0
        %v329 = vadd.f32 0.0, %v328
        %v330 = vpop.f32.mrf.mxu0
        %331 = vmatprep.mubr.f32.mxu0 0.0
        %332 = vmatmul.mubr.f32.gmra.mxu0 %v244
        %v333 = vpop.f32.mrf.mxu0
        %v334 = vadd.f32 0.0, %v333
        %v335 = vpop.f32.mrf.mxu0
        %336 = vdwg.mxu0
        %337 = vmatprep.subr.mxu0 0.0
        %338 = vmatpush1.msra.mxu0 %v242
        %339 = vmatprep.subr.mxu0 0.0
        %340 = vmatpush1.msra.mxu0 %v241
        %341 = vmatprep.subr.mxu0 0.0
        %342 = vmatpush1.msra.mxu0 %v240
        %343 = vmatprep.subr.mxu0 0.0
        %344 = vmatpush1.msra.mxu0 %v239
        %345 = vmatprep.subr.mxu0 0.0
        %346 = vmatpush1.msra.mxu0 %v238
        %347 = vmatprep.subr.mxu0 0.0
        %348 = vmatpush1.msra.mxu0 %v237
        %349 = vmatprep.subr.mxu0 0.0
        %350 = vmatpush1.msra.mxu0 %v236
        %351 = vmatprep.subr.mxu0 0.0
        %352 = vmatpush1.msra.mxu0 %v235
        %353 = vmatprep.subr.mxu0 0.0
        %354 = vmatpush1.msra.mxu0 %v234
        %355 = vmatprep.subr.mxu0 0.0
        %356 = vmatpush1.msra.mxu0 %v233
        %357 = vmatprep.subr.mxu0 0.0
        %358 = vmatpush1.msra.mxu0 %v232
        %359 = vmatprep.subr.mxu0 0.0
        %360 = vmatpush1.msra.mxu0 %v231
        %361 = vmatprep.subr.mxu0 0.0
        %362 = vmatpush1.msra.mxu0 %v230
        %363 = vmatprep.subr.mxu0 0.0
        %364 = vmatpush1.msra.mxu0 %v229
        %365 = vmatprep.subr.mxu0 0.0
        %366 = vmatpush1.msra.mxu0 %v228
        %367 = vmatprep.subr.mxu0 0.0
        %368 = vmatpush1.msra.mxu0 %v227
        %369 = vmatprep.subr.mxu0 0.0
        %370 = vmatpush2.msra.mxu0 0.0
        %371 = vmatprep.subr.mxu0 0.0
        %372 = vmatpush2.msra.mxu0 0.0
        %373 = vmatprep.subr.mxu0 0.0
        %374 = vmatpush2.msra.mxu0 0.0
        %375 = vmatprep.subr.mxu0 0.0
        %376 = vmatpush2.msra.mxu0 0.0
        %377 = vmatprep.subr.mxu0 0.0
        %378 = vmatpush2.msra.mxu0 0.0
        %379 = vmatprep.subr.mxu0 0.0
        %380 = vmatpush2.msra.mxu0 0.0
        %381 = vmatprep.subr.mxu0 0.0
        %382 = vmatpush2.msra.mxu0 0.0
        %383 = vmatprep.subr.mxu0 0.0
        %384 = vmatpush2.msra.mxu0 0.0
        %385 = vmatprep.subr.mxu0 0.0
        %386 = vmatpush2.msra.mxu0 0.0
        %387 = vmatprep.subr.mxu0 0.0
        %388 = vmatpush2.msra.mxu0 0.0
        %389 = vmatprep.subr.mxu0 0.0
        %390 = vmatpush2.msra.mxu0 0.0
        %391 = vmatprep.subr.mxu0 0.0
        %392 = vmatpush2.msra.mxu0 0.0
        %393 = vmatprep.subr.mxu0 0.0
        %394 = vmatpush2.msra.mxu0 0.0
        %395 = vmatprep.subr.mxu0 0.0
        %396 = vmatpush2.msra.mxu0 0.0
        %397 = vmatprep.subr.mxu0 0.0
        %398 = vmatpush2.msra.mxu0 0.0
        %399 = vmatprep.subr.mxu0 0.0
        %400 = vmatpush2.msra.mxu0 0.0
        %401 = vmatprep.mubr.f32.mxu0 0.0
        %402 = vmatmul.mubr.f32.gmra.mxu0 %v225
        %v403 = vpop.f32.mrf.mxu0
        %v404 = vadd.f32 %v329, %v403
        %v405 = vpop.f32.mrf.mxu0
        %406 = vmatprep.mubr.f32.mxu0 0.0
        %407 = vmatmul.mubr.f32.gmra.mxu0 %v226
        %v408 = vpop.f32.mrf.mxu0
        %v409 = vadd.f32 %v334, %v408
        %v410 = vpop.f32.mrf.mxu0
        %411 = vdwg.mxu0
        %v412 = vld [vmem:[#allocation2 + $0x2] sm:$0xff]
        %v413 = vld [vmem:[#allocation2 + $0xa] sm:$0xff]
        %s414 = scalar_lea.vmem [#allocation7], 256
        %v415 = vld [vmem:[%s414] sm:$0xff]
        %v416 = vld [vmem:[%s414 + $0x8] sm:$0xff]
        %v417 = vld [vmem:[%s414 + $0x10] sm:$0xff]
        %v418 = vld [vmem:[%s414 + $0x18] sm:$0xff]
        %v419 = vld [vmem:[%s414 + $0x20] sm:$0xff]
        %v420 = vld [vmem:[%s414 + $0x28] sm:$0xff]
        %v421 = vld [vmem:[%s414 + $0x30] sm:$0xff]
        %v422 = vld [vmem:[%s414 + $0x38] sm:$0xff]
        %v423 = vld [vmem:[%s414 + $0x40] sm:$0xff]
        %v424 = vld [vmem:[%s414 + $0x48] sm:$0xff]
        %v425 = vld [vmem:[%s414 + $0x50] sm:$0xff]
        %v426 = vld [vmem:[%s414 + $0x58] sm:$0xff]
        %v427 = vld [vmem:[%s414 + $0x60] sm:$0xff]
        %v428 = vld [vmem:[%s414 + $0x68] sm:$0xff]
        %v429 = vld [vmem:[%s414 + $0x70] sm:$0xff]
        %v430 = vld [vmem:[%s414 + $0x78] sm:$0xff]
        %431 = vmatprep.subr.mxu0 0.0
        %432 = vmatpush1.msra.mxu0 %v430
        %433 = vmatprep.subr.mxu0 0.0
        %434 = vmatpush1.msra.mxu0 %v429
        %435 = vmatprep.subr.mxu0 0.0
        %436 = vmatpush1.msra.mxu0 %v428
        %437 = vmatprep.subr.mxu0 0.0
        %438 = vmatpush1.msra.mxu0 %v427
        %439 = vmatprep.subr.mxu0 0.0
        %440 = vmatpush1.msra.mxu0 %v426
        %441 = vmatprep.subr.mxu0 0.0
        %442 = vmatpush1.msra.mxu0 %v425
        %443 = vmatprep.subr.mxu0 0.0
        %444 = vmatpush1.msra.mxu0 %v424
        %445 = vmatprep.subr.mxu0 0.0
        %446 = vmatpush1.msra.mxu0 %v423
        %447 = vmatprep.subr.mxu0 0.0
        %448 = vmatpush1.msra.mxu0 %v422
        %449 = vmatprep.subr.mxu0 0.0
        %450 = vmatpush1.msra.mxu0 %v421
        %451 = vmatprep.subr.mxu0 0.0
        %452 = vmatpush1.msra.mxu0 %v420
        %453 = vmatprep.subr.mxu0 0.0
        %454 = vmatpush1.msra.mxu0 %v419
        %455 = vmatprep.subr.mxu0 0.0
        %456 = vmatpush1.msra.mxu0 %v418
        %457 = vmatprep.subr.mxu0 0.0
        %458 = vmatpush1.msra.mxu0 %v417
        %459 = vmatprep.subr.mxu0 0.0
        %460 = vmatpush1.msra.mxu0 %v416
        %461 = vmatprep.subr.mxu0 0.0
        %462 = vmatpush1.msra.mxu0 %v415
        %463 = vmatprep.subr.mxu0 0.0
        %464 = vmatpush2.msra.mxu0 0.0
        %465 = vmatprep.subr.mxu0 0.0
        %466 = vmatpush2.msra.mxu0 0.0
        %467 = vmatprep.subr.mxu0 0.0
        %468 = vmatpush2.msra.mxu0 0.0
        %469 = vmatprep.subr.mxu0 0.0
        %470 = vmatpush2.msra.mxu0 0.0
        %471 = vmatprep.subr.mxu0 0.0
        %472 = vmatpush2.msra.mxu0 0.0
        %473 = vmatprep.subr.mxu0 0.0
        %474 = vmatpush2.msra.mxu0 0.0
        %475 = vmatprep.subr.mxu0 0.0
        %476 = vmatpush2.msra.mxu0 0.0
        %477 = vmatprep.subr.mxu0 0.0
        %478 = vmatpush2.msra.mxu0 0.0
        %479 = vmatprep.subr.mxu0 0.0
        %480 = vmatpush2.msra.mxu0 0.0
        %481 = vmatprep.subr.mxu0 0.0
        %482 = vmatpush2.msra.mxu0 0.0
        %483 = vmatprep.subr.mxu0 0.0
        %484 = vmatpush2.msra.mxu0 0.0
        %485 = vmatprep.subr.mxu0 0.0
        %486 = vmatpush2.msra.mxu0 0.0
        %487 = vmatprep.subr.mxu0 0.0
        %488 = vmatpush2.msra.mxu0 0.0
        %489 = vmatprep.subr.mxu0 0.0
        %490 = vmatpush2.msra.mxu0 0.0
        %491 = vmatprep.subr.mxu0 0.0
        %492 = vmatpush2.msra.mxu0 0.0
        %493 = vmatprep.subr.mxu0 0.0
        %494 = vmatpush2.msra.mxu0 0.0
        %495 = vmatprep.mubr.f32.mxu0 0.0
        %496 = vmatmul.mubr.f32.gmra.mxu0 %v412
        %v497 = vpop.f32.mrf.mxu0
        %v498 = vadd.f32 0.0, %v497
        %v499 = vpop.f32.mrf.mxu0
        %500 = vmatprep.mubr.f32.mxu0 0.0
        %501 = vmatmul.mubr.f32.gmra.mxu0 %v413
        %v502 = vpop.f32.mrf.mxu0
        %v503 = vadd.f32 0.0, %v502
        %v504 = vpop.f32.mrf.mxu0
        %505 = vdwg.mxu0
        %v506 = vadd.f32 %v404, %v498
        %v507 = vadd.f32 %v409, %v503
        %v508 = vlaneseq
        %v509 = vshrl.u32 %v508, 7
        %v510 = vsub.s32 0, %v509
        %v511 = vrot.slane %v224, %v510
        %v512 = vadd.f32 %v506, %v511
        %v513 = vadd.f32 %v507, %v511
        %v514 = vmax.f32 %v512, 0.0
        %v515 = vmax.f32 %v513, 0.0
        %516 = vst [vmem:[#allocation3 + $0x1] sm:$0xff] %v514
        %517 = vst [vmem:[#allocation3 + $0x9] sm:$0xff] %v515
        %v518 = vld [vmem:[#allocation3] sm:$0xff]
        %v519 = vld [vmem:[#allocation3 + $0x8] sm:$0xff]
        %s520 = scalar_lea.vmem [#allocation7], 384
        %v521 = vld [vmem:[%s520] sm:$0xff]
        %v522 = vld [vmem:[%s520 + $0x8] sm:$0xff]
        %v523 = vld [vmem:[%s520 + $0x10] sm:$0xff]
        %v524 = vld [vmem:[%s520 + $0x18] sm:$0xff]
        %v525 = vld [vmem:[%s520 + $0x20] sm:$0xff]
        %v526 = vld [vmem:[%s520 + $0x28] sm:$0xff]
        %v527 = vld [vmem:[%s520 + $0x30] sm:$0xff]
        %v528 = vld [vmem:[%s520 + $0x38] sm:$0xff]
        %v529 = vld [vmem:[%s520 + $0x40] sm:$0xff]
        %v530 = vld [vmem:[%s520 + $0x48] sm:$0xff]
        %v531 = vld [vmem:[%s520 + $0x50] sm:$0xff]
        %v532 = vld [vmem:[%s520 + $0x58] sm:$0xff]
        %v533 = vld [vmem:[%s520 + $0x60] sm:$0xff]
        %v534 = vld [vmem:[%s520 + $0x68] sm:$0xff]
        %v535 = vld [vmem:[%s520 + $0x70] sm:$0xff]
        %v536 = vld [vmem:[%s520 + $0x78] sm:$0xff]
        %v537 = vld [vmem:[#allocation3 + $0x1] sm:$0xff]
        %v538 = vld [vmem:[#allocation3 + $0x9] sm:$0xff]
        %s539 = scalar_lea.vmem [#allocation7], 512
        %v540 = vld [vmem:[%s539] sm:$0xff]
        %v541 = vld [vmem:[%s539 + $0x8] sm:$0xff]
        %v542 = vld [vmem:[%s539 + $0x10] sm:$0xff]
        %v543 = vld [vmem:[%s539 + $0x18] sm:$0xff]
        %v544 = vld [vmem:[%s539 + $0x20] sm:$0xff]
        %v545 = vld [vmem:[%s539 + $0x28] sm:$0xff]
        %v546 = vld [vmem:[%s539 + $0x30] sm:$0xff]
        %v547 = vld [vmem:[%s539 + $0x38] sm:$0xff]
        %v548 = vld [vmem:[%s539 + $0x40] sm:$0xff]
        %v549 = vld [vmem:[%s539 + $0x48] sm:$0xff]
        %v550 = vld [vmem:[%s539 + $0x50] sm:$0xff]
        %v551 = vld [vmem:[%s539 + $0x58] sm:$0xff]
        %v552 = vld [vmem:[%s539 + $0x60] sm:$0xff]
        %v553 = vld [vmem:[%s539 + $0x68] sm:$0xff]
        %v554 = vld [vmem:[%s539 + $0x70] sm:$0xff]
        %v555 = vld [vmem:[%s539 + $0x78] sm:$0xff]
        %556 = vmatprep.subr.mxu0 0.0
        %557 = vmatpush1.msra.mxu0 %v555
        %558 = vmatprep.subr.mxu0 0.0
        %559 = vmatpush1.msra.mxu0 %v554
        %560 = vmatprep.subr.mxu0 0.0
        %561 = vmatpush1.msra.mxu0 %v553
        %562 = vmatprep.subr.mxu0 0.0
        %563 = vmatpush1.msra.mxu0 %v552
        %564 = vmatprep.subr.mxu0 0.0
        %565 = vmatpush1.msra.mxu0 %v551
        %566 = vmatprep.subr.mxu0 0.0
        %567 = vmatpush1.msra.mxu0 %v550
        %568 = vmatprep.subr.mxu0 0.0
        %569 = vmatpush1.msra.mxu0 %v549
        %570 = vmatprep.subr.mxu0 0.0
        %571 = vmatpush1.msra.mxu0 %v548
        %572 = vmatprep.subr.mxu0 0.0
        %573 = vmatpush1.msra.mxu0 %v547
        %574 = vmatprep.subr.mxu0 0.0
        %575 = vmatpush1.msra.mxu0 %v546
        %576 = vmatprep.subr.mxu0 0.0
        %577 = vmatpush1.msra.mxu0 %v545
        %578 = vmatprep.subr.mxu0 0.0
        %579 = vmatpush1.msra.mxu0 %v544
        %580 = vmatprep.subr.mxu0 0.0
        %581 = vmatpush1.msra.mxu0 %v543
        %582 = vmatprep.subr.mxu0 0.0
        %583 = vmatpush1.msra.mxu0 %v542
        %584 = vmatprep.subr.mxu0 0.0
        %585 = vmatpush1.msra.mxu0 %v541
        %586 = vmatprep.subr.mxu0 0.0
        %587 = vmatpush1.msra.mxu0 %v540
        %588 = vmatprep.subr.mxu0 0.0
        %589 = vmatpush2.msra.mxu0 0.0
        %590 = vmatprep.subr.mxu0 0.0
        %591 = vmatpush2.msra.mxu0 0.0
        %592 = vmatprep.subr.mxu0 0.0
        %593 = vmatpush2.msra.mxu0 0.0
        %594 = vmatprep.subr.mxu0 0.0
        %595 = vmatpush2.msra.mxu0 0.0
        %596 = vmatprep.subr.mxu0 0.0
        %597 = vmatpush2.msra.mxu0 0.0
        %598 = vmatprep.subr.mxu0 0.0
        %599 = vmatpush2.msra.mxu0 0.0
        %600 = vmatprep.subr.mxu0 0.0
        %601 = vmatpush2.msra.mxu0 0.0
        %602 = vmatprep.subr.mxu0 0.0
        %603 = vmatpush2.msra.mxu0 0.0
        %604 = vmatprep.subr.mxu0 0.0
        %605 = vmatpush2.msra.mxu0 0.0
        %606 = vmatprep.subr.mxu0 0.0
        %607 = vmatpush2.msra.mxu0 0.0
        %608 = vmatprep.subr.mxu0 0.0
        %609 = vmatpush2.msra.mxu0 0.0
        %610 = vmatprep.subr.mxu0 0.0
        %611 = vmatpush2.msra.mxu0 0.0
        %612 = vmatprep.subr.mxu0 0.0
        %613 = vmatpush2.msra.mxu0 0.0
        %614 = vmatprep.subr.mxu0 0.0
        %615 = vmatpush2.msra.mxu0 0.0
        %616 = vmatprep.subr.mxu0 0.0
        %617 = vmatpush2.msra.mxu0 0.0
        %618 = vmatprep.subr.mxu0 0.0
        %619 = vmatpush2.msra.mxu0 0.0
        %620 = vmatprep.mubr.f32.mxu0 0.0
        %621 = vmatmul.mubr.f32.gmra.mxu0 %v537
        %v622 = vpop.f32.mrf.mxu0
        %v623 = vadd.f32 0.0, %v622
        %v624 = vpop.f32.mrf.mxu0
        %625 = vmatprep.mubr.f32.mxu0 0.0
        %626 = vmatmul.mubr.f32.gmra.mxu0 %v538
        %v627 = vpop.f32.mrf.mxu0
        %v628 = vadd.f32 0.0, %v627
        %v629 = vpop.f32.mrf.mxu0
        %630 = vdwg.mxu0
        %631 = vmatprep.subr.mxu0 0.0
        %632 = vmatpush1.msra.mxu0 %v536
        %633 = vmatprep.subr.mxu0 0.0
        %634 = vmatpush1.msra.mxu0 %v535
        %635 = vmatprep.subr.mxu0 0.0
        %636 = vmatpush1.msra.mxu0 %v534
        %637 = vmatprep.subr.mxu0 0.0
        %638 = vmatpush1.msra.mxu0 %v533
        %639 = vmatprep.subr.mxu0 0.0
        %640 = vmatpush1.msra.mxu0 %v532
        %641 = vmatprep.subr.mxu0 0.0
        %642 = vmatpush1.msra.mxu0 %v531
        %643 = vmatprep.subr.mxu0 0.0
        %644 = vmatpush1.msra.mxu0 %v530
        %645 = vmatprep.subr.mxu0 0.0
        %646 = vmatpush1.msra.mxu0 %v529
        %647 = vmatprep.subr.mxu0 0.0
        %648 = vmatpush1.msra.mxu0 %v528
        %649 = vmatprep.subr.mxu0 0.0
        %650 = vmatpush1.msra.mxu0 %v527
        %651 = vmatprep.subr.mxu0 0.0
        %652 = vmatpush1.msra.mxu0 %v526
        %653 = vmatprep.subr.mxu0 0.0
        %654 = vmatpush1.msra.mxu0 %v525
        %655 = vmatprep.subr.mxu0 0.0
        %656 = vmatpush1.msra.mxu0 %v524
        %657 = vmatprep.subr.mxu0 0.0
        %658 = vmatpush1.msra.mxu0 %v523
        %659 = vmatprep.subr.mxu0 0.0
        %660 = vmatpush1.msra.mxu0 %v522
        %661 = vmatprep.subr.mxu0 0.0
        %662 = vmatpush1.msra.mxu0 %v521
        %663 = vmatprep.subr.mxu0 0.0
        %664 = vmatpush2.msra.mxu0 0.0
        %665 = vmatprep.subr.mxu0 0.0
        %666 = vmatpush2.msra.mxu0 0.0
        %667 = vmatprep.subr.mxu0 0.0
        %668 = vmatpush2.msra.mxu0 0.0
        %669 = vmatprep.subr.mxu0 0.0
        %670 = vmatpush2.msra.mxu0 0.0
        %671 = vmatprep.subr.mxu0 0.0
        %672 = vmatpush2.msra.mxu0 0.0
        %673 = vmatprep.subr.mxu0 0.0
        %674 = vmatpush2.msra.mxu0 0.0
        %675 = vmatprep.subr.mxu0 0.0
        %676 = vmatpush2.msra.mxu0 0.0
        %677 = vmatprep.subr.mxu0 0.0
        %678 = vmatpush2.msra.mxu0 0.0
        %679 = vmatprep.subr.mxu0 0.0
        %680 = vmatpush2.msra.mxu0 0.0
        %681 = vmatprep.subr.mxu0 0.0
        %682 = vmatpush2.msra.mxu0 0.0
        %683 = vmatprep.subr.mxu0 0.0
        %684 = vmatpush2.msra.mxu0 0.0
        %685 = vmatprep.subr.mxu0 0.0
        %686 = vmatpush2.msra.mxu0 0.0
        %687 = vmatprep.subr.mxu0 0.0
        %688 = vmatpush2.msra.mxu0 0.0
        %689 = vmatprep.subr.mxu0 0.0
        %690 = vmatpush2.msra.mxu0 0.0
        %691 = vmatprep.subr.mxu0 0.0
        %692 = vmatpush2.msra.mxu0 0.0
        %693 = vmatprep.subr.mxu0 0.0
        %694 = vmatpush2.msra.mxu0 0.0
        %695 = vmatprep.mubr.f32.mxu0 0.0
        %696 = vmatmul.mubr.f32.gmra.mxu0 %v518
        %v697 = vpop.f32.mrf.mxu0
        %v698 = vadd.f32 %v623, %v697
        %v699 = vpop.f32.mrf.mxu0
        %700 = vmatprep.mubr.f32.mxu0 0.0
        %701 = vmatmul.mubr.f32.gmra.mxu0 %v519
        %v702 = vpop.f32.mrf.mxu0
        %v703 = vadd.f32 %v628, %v702
        %v704 = vpop.f32.mrf.mxu0
        %705 = vdwg.mxu0
        %v706 = vld [vmem:[#allocation3 + $0x2] sm:$0xff]
        %v707 = vld [vmem:[#allocation3 + $0xa] sm:$0xff]
        %s708 = scalar_lea.vmem [#allocation7], 640
        %v709 = vld [vmem:[%s708] sm:$0xff]
        %v710 = vld [vmem:[%s708 + $0x8] sm:$0xff]
        %v711 = vld [vmem:[%s708 + $0x10] sm:$0xff]
        %v712 = vld [vmem:[%s708 + $0x18] sm:$0xff]
        %v713 = vld [vmem:[%s708 + $0x20] sm:$0xff]
        %v714 = vld [vmem:[%s708 + $0x28] sm:$0xff]
        %v715 = vld [vmem:[%s708 + $0x30] sm:$0xff]
        %v716 = vld [vmem:[%s708 + $0x38] sm:$0xff]
        %v717 = vld [vmem:[%s708 + $0x40] sm:$0xff]
        %v718 = vld [vmem:[%s708 + $0x48] sm:$0xff]
        %v719 = vld [vmem:[%s708 + $0x50] sm:$0xff]
        %v720 = vld [vmem:[%s708 + $0x58] sm:$0xff]
        %v721 = vld [vmem:[%s708 + $0x60] sm:$0xff]
        %v722 = vld [vmem:[%s708 + $0x68] sm:$0xff]
        %v723 = vld [vmem:[%s708 + $0x70] sm:$0xff]
        %v724 = vld [vmem:[%s708 + $0x78] sm:$0xff]
        %725 = vmatprep.subr.mxu0 0.0
        %726 = vmatpush1.msra.mxu0 %v724
        %727 = vmatprep.subr.mxu0 0.0
        %728 = vmatpush1.msra.mxu0 %v723
        %729 = vmatprep.subr.mxu0 0.0
        %730 = vmatpush1.msra.mxu0 %v722
        %731 = vmatprep.subr.mxu0 0.0
        %732 = vmatpush1.msra.mxu0 %v721
        %733 = vmatprep.subr.mxu0 0.0
        %734 = vmatpush1.msra.mxu0 %v720
        %735 = vmatprep.subr.mxu0 0.0
        %736 = vmatpush1.msra.mxu0 %v719
        %737 = vmatprep.subr.mxu0 0.0
        %738 = vmatpush1.msra.mxu0 %v718
        %739 = vmatprep.subr.mxu0 0.0
        %740 = vmatpush1.msra.mxu0 %v717
        %741 = vmatprep.subr.mxu0 0.0
        %742 = vmatpush1.msra.mxu0 %v716
        %743 = vmatprep.subr.mxu0 0.0
        %744 = vmatpush1.msra.mxu0 %v715
        %745 = vmatprep.subr.mxu0 0.0
        %746 = vmatpush1.msra.mxu0 %v714
        %747 = vmatprep.subr.mxu0 0.0
        %748 = vmatpush1.msra.mxu0 %v713
        %749 = vmatprep.subr.mxu0 0.0
        %750 = vmatpush1.msra.mxu0 %v712
        %751 = vmatprep.subr.mxu0 0.0
        %752 = vmatpush1.msra.mxu0 %v711
        %753 = vmatprep.subr.mxu0 0.0
        %754 = vmatpush1.msra.mxu0 %v710
        %755 = vmatprep.subr.mxu0 0.0
        %756 = vmatpush1.msra.mxu0 %v709
        %757 = vmatprep.subr.mxu0 0.0
        %758 = vmatpush2.msra.mxu0 0.0
        %759 = vmatprep.subr.mxu0 0.0
        %760 = vmatpush2.msra.mxu0 0.0
        %761 = vmatprep.subr.mxu0 0.0
        %762 = vmatpush2.msra.mxu0 0.0
        %763 = vmatprep.subr.mxu0 0.0
        %764 = vmatpush2.msra.mxu0 0.0
        %765 = vmatprep.subr.mxu0 0.0
        %766 = vmatpush2.msra.mxu0 0.0
        %767 = vmatprep.subr.mxu0 0.0
        %768 = vmatpush2.msra.mxu0 0.0
        %769 = vmatprep.subr.mxu0 0.0
        %770 = vmatpush2.msra.mxu0 0.0
        %771 = vmatprep.subr.mxu0 0.0
        %772 = vmatpush2.msra.mxu0 0.0
        %773 = vmatprep.subr.mxu0 0.0
        %774 = vmatpush2.msra.mxu0 0.0
        %775 = vmatprep.subr.mxu0 0.0
        %776 = vmatpush2.msra.mxu0 0.0
        %777 = vmatprep.subr.mxu0 0.0
        %778 = vmatpush2.msra.mxu0 0.0
        %779 = vmatprep.subr.mxu0 0.0
        %780 = vmatpush2.msra.mxu0 0.0
        %781 = vmatprep.subr.mxu0 0.0
        %782 = vmatpush2.msra.mxu0 0.0
        %783 = vmatprep.subr.mxu0 0.0
        %784 = vmatpush2.msra.mxu0 0.0
        %785 = vmatprep.subr.mxu0 0.0
        %786 = vmatpush2.msra.mxu0 0.0
        %787 = vmatprep.subr.mxu0 0.0
        %788 = vmatpush2.msra.mxu0 0.0
        %789 = vmatprep.mubr.f32.mxu0 0.0
        %790 = vmatmul.mubr.f32.gmra.mxu0 %v706
        %v791 = vpop.f32.mrf.mxu0
        %v792 = vadd.f32 0.0, %v791
        %v793 = vpop.f32.mrf.mxu0
        %794 = vmatprep.mubr.f32.mxu0 0.0
        %795 = vmatmul.mubr.f32.gmra.mxu0 %v707
        %v796 = vpop.f32.mrf.mxu0
        %v797 = vadd.f32 0.0, %v796
        %v798 = vpop.f32.mrf.mxu0
        %799 = vdwg.mxu0
        %v800 = vadd.f32 %v698, %v792
        %v801 = vadd.f32 %v703, %v797
        %v802 = vlaneseq
        %v803 = vshrl.u32 %v802, 7
        %v804 = vsub.s32 1, %v803
        %v805 = vrot.slane %v224, %v804
        %v806 = vadd.f32 %v800, %v805
        %v807 = vadd.f32 %v801, %v805
        %v808 = vmax.f32 %v806, 0.0
        %v809 = vmax.f32 %v807, 0.0
        %810 = vst [vmem:[#allocation2 + $0x1] sm:$0xff] %v808
        %811 = vst [vmem:[#allocation2 + $0x9] sm:$0xff] %v809
        %v812 = vld [vmem:[#allocation2] sm:$0xff]
        %v813 = vld [vmem:[#allocation2 + $0x8] sm:$0xff]
        %s814 = scalar_lea.vmem [#allocation7], 768
        %v815 = vld [vmem:[%s814] sm:$0xff]
        %v816 = vld [vmem:[%s814 + $0x8] sm:$0xff]
        %v817 = vld [vmem:[%s814 + $0x10] sm:$0xff]
        %v818 = vld [vmem:[%s814 + $0x18] sm:$0xff]
        %v819 = vld [vmem:[%s814 + $0x20] sm:$0xff]
        %v820 = vld [vmem:[%s814 + $0x28] sm:$0xff]
        %v821 = vld [vmem:[%s814 + $0x30] sm:$0xff]
        %v822 = vld [vmem:[%s814 + $0x38] sm:$0xff]
        %v823 = vld [vmem:[%s814 + $0x40] sm:$0xff]
        %v824 = vld [vmem:[%s814 + $0x48] sm:$0xff]
        %v825 = vld [vmem:[%s814 + $0x50] sm:$0xff]
        %v826 = vld [vmem:[%s814 + $0x58] sm:$0xff]
        %v827 = vld [vmem:[%s814 + $0x60] sm:$0xff]
        %v828 = vld [vmem:[%s814 + $0x68] sm:$0xff]
        %v829 = vld [vmem:[%s814 + $0x70] sm:$0xff]
        %v830 = vld [vmem:[%s814 + $0x78] sm:$0xff]
        %v831 = vld [vmem:[#allocation2 + $0x1] sm:$0xff]
        %v832 = vld [vmem:[#allocation2 + $0x9] sm:$0xff]
        %s833 = scalar_lea.vmem [#allocation7], 896
        %v834 = vld [vmem:[%s833] sm:$0xff]
        %v835 = vld [vmem:[%s833 + $0x8] sm:$0xff]
        %v836 = vld [vmem:[%s833 + $0x10] sm:$0xff]
        %v837 = vld [vmem:[%s833 + $0x18] sm:$0xff]
        %v838 = vld [vmem:[%s833 + $0x20] sm:$0xff]
        %v839 = vld [vmem:[%s833 + $0x28] sm:$0xff]
        %v840 = vld [vmem:[%s833 + $0x30] sm:$0xff]
        %v841 = vld [vmem:[%s833 + $0x38] sm:$0xff]
        %v842 = vld [vmem:[%s833 + $0x40] sm:$0xff]
        %v843 = vld [vmem:[%s833 + $0x48] sm:$0xff]
        %v844 = vld [vmem:[%s833 + $0x50] sm:$0xff]
        %v845 = vld [vmem:[%s833 + $0x58] sm:$0xff]
        %v846 = vld [vmem:[%s833 + $0x60] sm:$0xff]
        %v847 = vld [vmem:[%s833 + $0x68] sm:$0xff]
        %v848 = vld [vmem:[%s833 + $0x70] sm:$0xff]
        %v849 = vld [vmem:[%s833 + $0x78] sm:$0xff]
        %850 = vmatprep.subr.mxu0 0.0
        %851 = vmatpush1.msra.mxu0 %v849
        %852 = vmatprep.subr.mxu0 0.0
        %853 = vmatpush1.msra.mxu0 %v848
        %854 = vmatprep.subr.mxu0 0.0
        %855 = vmatpush1.msra.mxu0 %v847
        %856 = vmatprep.subr.mxu0 0.0
        %857 = vmatpush1.msra.mxu0 %v846
        %858 = vmatprep.subr.mxu0 0.0
        %859 = vmatpush1.msra.mxu0 %v845
        %860 = vmatprep.subr.mxu0 0.0
        %861 = vmatpush1.msra.mxu0 %v844
        %862 = vmatprep.subr.mxu0 0.0
        %863 = vmatpush1.msra.mxu0 %v843
        %864 = vmatprep.subr.mxu0 0.0
        %865 = vmatpush1.msra.mxu0 %v842
        %866 = vmatprep.subr.mxu0 0.0
        %867 = vmatpush1.msra.mxu0 %v841
        %868 = vmatprep.subr.mxu0 0.0
        %869 = vmatpush1.msra.mxu0 %v840
        %870 = vmatprep.subr.mxu0 0.0
        %871 = vmatpush1.msra.mxu0 %v839
        %872 = vmatprep.subr.mxu0 0.0
        %873 = vmatpush1.msra.mxu0 %v838
        %874 = vmatprep.subr.mxu0 0.0
        %875 = vmatpush1.msra.mxu0 %v837
        %876 = vmatprep.subr.mxu0 0.0
        %877 = vmatpush1.msra.mxu0 %v836
        %878 = vmatprep.subr.mxu0 0.0
        %879 = vmatpush1.msra.mxu0 %v835
        %880 = vmatprep.subr.mxu0 0.0
        %881 = vmatpush1.msra.mxu0 %v834
        %882 = vmatprep.subr.mxu0 0.0
        %883 = vmatpush2.msra.mxu0 0.0
        %884 = vmatprep.subr.mxu0 0.0
        %885 = vmatpush2.msra.mxu0 0.0
        %886 = vmatprep.subr.mxu0 0.0
        %887 = vmatpush2.msra.mxu0 0.0
        %888 = vmatprep.subr.mxu0 0.0
        %889 = vmatpush2.msra.mxu0 0.0
        %890 = vmatprep.subr.mxu0 0.0
        %891 = vmatpush2.msra.mxu0 0.0
        %892 = vmatprep.subr.mxu0 0.0
        %893 = vmatpush2.msra.mxu0 0.0
        %894 = vmatprep.subr.mxu0 0.0
        %895 = vmatpush2.msra.mxu0 0.0
        %896 = vmatprep.subr.mxu0 0.0
        %897 = vmatpush2.msra.mxu0 0.0
        %898 = vmatprep.subr.mxu0 0.0
        %899 = vmatpush2.msra.mxu0 0.0
        %900 = vmatprep.subr.mxu0 0.0
        %901 = vmatpush2.msra.mxu0 0.0
        %902 = vmatprep.subr.mxu0 0.0
        %903 = vmatpush2.msra.mxu0 0.0
        %904 = vmatprep.subr.mxu0 0.0
        %905 = vmatpush2.msra.mxu0 0.0
        %906 = vmatprep.subr.mxu0 0.0
        %907 = vmatpush2.msra.mxu0 0.0
        %908 = vmatprep.subr.mxu0 0.0
        %909 = vmatpush2.msra.mxu0 0.0
        %910 = vmatprep.subr.mxu0 0.0
        %911 = vmatpush2.msra.mxu0 0.0
        %912 = vmatprep.subr.mxu0 0.0
        %913 = vmatpush2.msra.mxu0 0.0
        %914 = vmatprep.mubr.f32.mxu0 0.0
        %915 = vmatmul.mubr.f32.gmra.mxu0 %v831
        %v916 = vpop.f32.mrf.mxu0
        %v917 = vadd.f32 0.0, %v916
        %v918 = vpop.f32.mrf.mxu0
        %919 = vmatprep.mubr.f32.mxu0 0.0
        %920 = vmatmul.mubr.f32.gmra.mxu0 %v832
        %v921 = vpop.f32.mrf.mxu0
        %v922 = vadd.f32 0.0, %v921
        %v923 = vpop.f32.mrf.mxu0
        %924 = vdwg.mxu0
        %925 = vmatprep.subr.mxu0 0.0
        %926 = vmatpush1.msra.mxu0 %v830
        %927 = vmatprep.subr.mxu0 0.0
        %928 = vmatpush1.msra.mxu0 %v829
        %929 = vmatprep.subr.mxu0 0.0
        %930 = vmatpush1.msra.mxu0 %v828
        %931 = vmatprep.subr.mxu0 0.0
        %932 = vmatpush1.msra.mxu0 %v827
        %933 = vmatprep.subr.mxu0 0.0
        %934 = vmatpush1.msra.mxu0 %v826
        %935 = vmatprep.subr.mxu0 0.0
        %936 = vmatpush1.msra.mxu0 %v825
        %937 = vmatprep.subr.mxu0 0.0
        %938 = vmatpush1.msra.mxu0 %v824
        %939 = vmatprep.subr.mxu0 0.0
        %940 = vmatpush1.msra.mxu0 %v823
        %941 = vmatprep.subr.mxu0 0.0
        %942 = vmatpush1.msra.mxu0 %v822
        %943 = vmatprep.subr.mxu0 0.0
        %944 = vmatpush1.msra.mxu0 %v821
        %945 = vmatprep.subr.mxu0 0.0
        %946 = vmatpush1.msra.mxu0 %v820
        %947 = vmatprep.subr.mxu0 0.0
        %948 = vmatpush1.msra.mxu0 %v819
        %949 = vmatprep.subr.mxu0 0.0
        %950 = vmatpush1.msra.mxu0 %v818
        %951 = vmatprep.subr.mxu0 0.0
        %952 = vmatpush1.msra.mxu0 %v817
        %953 = vmatprep.subr.mxu0 0.0
        %954 = vmatpush1.msra.mxu0 %v816
        %955 = vmatprep.subr.mxu0 0.0
        %956 = vmatpush1.msra.mxu0 %v815
        %957 = vmatprep.subr.mxu0 0.0
        %958 = vmatpush2.msra.mxu0 0.0
        %959 = vmatprep.subr.mxu0 0.0
        %960 = vmatpush2.msra.mxu0 0.0
        %961 = vmatprep.subr.mxu0 0.0
        %962 = vmatpush2.msra.mxu0 0.0
        %963 = vmatprep.subr.mxu0 0.0
        %964 = vmatpush2.msra.mxu0 0.0
        %965 = vmatprep.subr.mxu0 0.0
        %966 = vmatpush2.msra.mxu0 0.0
        %967 = vmatprep.subr.mxu0 0.0
        %968 = vmatpush2.msra.mxu0 0.0
        %969 = vmatprep.subr.mxu0 0.0
        %970 = vmatpush2.msra.mxu0 0.0
        %971 = vmatprep.subr.mxu0 0.0
        %972 = vmatpush2.msra.mxu0 0.0
        %973 = vmatprep.subr.mxu0 0.0
        %974 = vmatpush2.msra.mxu0 0.0
        %975 = vmatprep.subr.mxu0 0.0
        %976 = vmatpush2.msra.mxu0 0.0
        %977 = vmatprep.subr.mxu0 0.0
        %978 = vmatpush2.msra.mxu0 0.0
        %979 = vmatprep.subr.mxu0 0.0
        %980 = vmatpush2.msra.mxu0 0.0
        %981 = vmatprep.subr.mxu0 0.0
        %982 = vmatpush2.msra.mxu0 0.0
        %983 = vmatprep.subr.mxu0 0.0
        %984 = vmatpush2.msra.mxu0 0.0
        %985 = vmatprep.subr.mxu0 0.0
        %986 = vmatpush2.msra.mxu0 0.0
        %987 = vmatprep.subr.mxu0 0.0
        %988 = vmatpush2.msra.mxu0 0.0
        %989 = vmatprep.mubr.f32.mxu0 0.0
        %990 = vmatmul.mubr.f32.gmra.mxu0 %v812
        %v991 = vpop.f32.mrf.mxu0
        %v992 = vadd.f32 %v917, %v991
        %v993 = vpop.f32.mrf.mxu0
        %994 = vmatprep.mubr.f32.mxu0 0.0
        %995 = vmatmul.mubr.f32.gmra.mxu0 %v813
        %v996 = vpop.f32.mrf.mxu0
        %v997 = vadd.f32 %v922, %v996
        %v998 = vpop.f32.mrf.mxu0
        %999 = vdwg.mxu0
        %v1000 = vld [vmem:[#allocation2 + $0x2] sm:$0xff]
        %v1001 = vld [vmem:[#allocation2 + $0xa] sm:$0xff]
        %s1002 = scalar_lea.vmem [#allocation7], 1024
        %v1003 = vld [vmem:[%s1002] sm:$0xff]
        %v1004 = vld [vmem:[%s1002 + $0x8] sm:$0xff]
        %v1005 = vld [vmem:[%s1002 + $0x10] sm:$0xff]
        %v1006 = vld [vmem:[%s1002 + $0x18] sm:$0xff]
        %v1007 = vld [vmem:[%s1002 + $0x20] sm:$0xff]
        %v1008 = vld [vmem:[%s1002 + $0x28] sm:$0xff]
        %v1009 = vld [vmem:[%s1002 + $0x30] sm:$0xff]
        %v1010 = vld [vmem:[%s1002 + $0x38] sm:$0xff]
        %v1011 = vld [vmem:[%s1002 + $0x40] sm:$0xff]
        %v1012 = vld [vmem:[%s1002 + $0x48] sm:$0xff]
        %v1013 = vld [vmem:[%s1002 + $0x50] sm:$0xff]
        %v1014 = vld [vmem:[%s1002 + $0x58] sm:$0xff]
        %v1015 = vld [vmem:[%s1002 + $0x60] sm:$0xff]
        %v1016 = vld [vmem:[%s1002 + $0x68] sm:$0xff]
        %v1017 = vld [vmem:[%s1002 + $0x70] sm:$0xff]
        %v1018 = vld [vmem:[%s1002 + $0x78] sm:$0xff]
        %1019 = vmatprep.subr.mxu0 0.0
        %1020 = vmatpush1.msra.mxu0 %v1018
        %1021 = vmatprep.subr.mxu0 0.0
        %1022 = vmatpush1.msra.mxu0 %v1017
        %1023 = vmatprep.subr.mxu0 0.0
        %1024 = vmatpush1.msra.mxu0 %v1016
        %1025 = vmatprep.subr.mxu0 0.0
        %1026 = vmatpush1.msra.mxu0 %v1015
        %1027 = vmatprep.subr.mxu0 0.0
        %1028 = vmatpush1.msra.mxu0 %v1014
        %1029 = vmatprep.subr.mxu0 0.0
        %1030 = vmatpush1.msra.mxu0 %v1013
        %1031 = vmatprep.subr.mxu0 0.0
        %1032 = vmatpush1.msra.mxu0 %v1012
        %1033 = vmatprep.subr.mxu0 0.0
        %1034 = vmatpush1.msra.mxu0 %v1011
        %1035 = vmatprep.subr.mxu0 0.0
        %1036 = vmatpush1.msra.mxu0 %v1010
        %1037 = vmatprep.subr.mxu0 0.0
        %1038 = vmatpush1.msra.mxu0 %v1009
        %1039 = vmatprep.subr.mxu0 0.0
        %1040 = vmatpush1.msra.mxu0 %v1008
        %1041 = vmatprep.subr.mxu0 0.0
        %1042 = vmatpush1.msra.mxu0 %v1007
        %1043 = vmatprep.subr.mxu0 0.0
        %1044 = vmatpush1.msra.mxu0 %v1006
        %1045 = vmatprep.subr.mxu0 0.0
        %1046 = vmatpush1.msra.mxu0 %v1005
        %1047 = vmatprep.subr.mxu0 0.0
        %1048 = vmatpush1.msra.mxu0 %v1004
        %1049 = vmatprep.subr.mxu0 0.0
        %1050 = vmatpush1.msra.mxu0 %v1003
        %1051 = vmatprep.subr.mxu0 0.0
        %1052 = vmatpush2.msra.mxu0 0.0
        %1053 = vmatprep.subr.mxu0 0.0
        %1054 = vmatpush2.msra.mxu0 0.0
        %1055 = vmatprep.subr.mxu0 0.0
        %1056 = vmatpush2.msra.mxu0 0.0
        %1057 = vmatprep.subr.mxu0 0.0
        %1058 = vmatpush2.msra.mxu0 0.0
        %1059 = vmatprep.subr.mxu0 0.0
        %1060 = vmatpush2.msra.mxu0 0.0
        %1061 = vmatprep.subr.mxu0 0.0
        %1062 = vmatpush2.msra.mxu0 0.0
        %1063 = vmatprep.subr.mxu0 0.0
        %1064 = vmatpush2.msra.mxu0 0.0
        %1065 = vmatprep.subr.mxu0 0.0
        %1066 = vmatpush2.msra.mxu0 0.0
        %1067 = vmatprep.subr.mxu0 0.0
        %1068 = vmatpush2.msra.mxu0 0.0
        %1069 = vmatprep.subr.mxu0 0.0
        %1070 = vmatpush2.msra.mxu0 0.0
        %1071 = vmatprep.subr.mxu0 0.0
        %1072 = vmatpush2.msra.mxu0 0.0
        %1073 = vmatprep.subr.mxu0 0.0
        %1074 = vmatpush2.msra.mxu0 0.0
        %1075 = vmatprep.subr.mxu0 0.0
        %1076 = vmatpush2.msra.mxu0 0.0
        %1077 = vmatprep.subr.mxu0 0.0
        %1078 = vmatpush2.msra.mxu0 0.0
        %1079 = vmatprep.subr.mxu0 0.0
        %1080 = vmatpush2.msra.mxu0 0.0
        %1081 = vmatprep.subr.mxu0 0.0
        %1082 = vmatpush2.msra.mxu0 0.0
        %1083 = vmatprep.mubr.f32.mxu0 0.0
        %1084 = vmatmul.mubr.f32.gmra.mxu0 %v1000
        %v1085 = vpop.f32.mrf.mxu0
        %v1086 = vadd.f32 0.0, %v1085
        %v1087 = vpop.f32.mrf.mxu0
        %1088 = vmatprep.mubr.f32.mxu0 0.0
        %1089 = vmatmul.mubr.f32.gmra.mxu0 %v1001
        %v1090 = vpop.f32.mrf.mxu0
        %v1091 = vadd.f32 0.0, %v1090
        %v1092 = vpop.f32.mrf.mxu0
        %1093 = vdwg.mxu0
        %v1094 = vadd.f32 %v992, %v1086
        %v1095 = vadd.f32 %v997, %v1091
        %v1096 = vlaneseq
        %v1097 = vshrl.u32 %v1096, 7
        %v1098 = vsub.s32 2, %v1097
        %v1099 = vrot.slane %v224, %v1098
        %v1100 = vadd.f32 %v1094, %v1099
        %v1101 = vadd.f32 %v1095, %v1099
        %v1102 = vmax.f32 %v1100, 0.0
        %v1103 = vmax.f32 %v1101, 0.0
        %v1104 = vld [vmem:[%s185] sm:$0xff]
        %v1105 = vld [vmem:[%s185 + $0x8] sm:$0xff]
        %v1106 = vadd.f32 %v1102, %v1104
        %v1107 = vadd.f32 %v1103, %v1105
        %v1108 = vmax.f32 %v1106, 0.0
        %v1109 = vmax.f32 %v1107, 0.0
        %1110 = vst [vmem:[%s215] sm:$0xff] %v1108
        %1111 = vst [vmem:[%s215 + $0x8] sm:$0xff] %v1109
        %s1112 = sand.u32 %s97, 1
        %s1113 = scalar_lea.sflag [#allocation6], %s1112
        %s1114 = sand.u32 %s97, 1
        %s1115 = smul.addr %s1114, 16
        %s1116 = scalar_lea.vmem [#allocation10], %s1115
        // Predicated region
        $region45: #{tpu_custom_call.1} parent=31 // pred_check
          %p1117 = pneg %p107
        $region46: #{tpu_custom_call.1} parent=31 // pred_check_branch
          %1119 = sbr.rel (%p1117) target = $region48
        $region47: #{tpu_custom_call.1} parent=31 // pred_region
          %s1121 = ssub.s32 256, 256
          %1122 = vsyncadd %s1113, %s1121
          %s1123 = smul.addr %s21, 2
          %s1124 = smul.addr %s1123, 128
          %s1125 = scalar_lea.hbm %s3, %s1124
          %s1126 = sshll.u32 %s1116, 4
          %s1127 = int_to_ptr.vmem [resolvable:$true] %s1126
          %1132 = dma.vmem_to_hbm [thread:$0]  %s1127, 256, %s1125, %s1113, 128, 128, 8
        $region48: #{tpu_custom_call.1} parent=31 // pred_fallthru
          _
      $region32: #{tpu_custom_call.1} parent=5 // pred_fallthru
        _
      %p1133 = scmp.le.s32.totalorder 2, %s16
      // Predicated region
      $region49: #{tpu_custom_call.1} parent=5 // pred_check
        %p1134 = pneg %p1133
      $region50: #{tpu_custom_call.1} parent=5 // pred_check_branch
        %1136 = sbr.rel (%p1134) target = $region52
      $region51: #{tpu_custom_call.1} parent=5 // pred_region
        %s1137 = ssub.s32 %s16, 2
        // Predicated region
        $region53: #{tpu_custom_call.1} parent=51 // pred_check
          %p1138 = pneg %p113
        $region54: #{tpu_custom_call.1} parent=51 // pred_check_branch
          %1140 = sbr.rel (%p1138) target = $region56
        $region55: #{tpu_custom_call.1} parent=51 // pred_region
          %s1141 = sand.u32 %s98, 1
          %s1142 = scalar_lea.sflag [#allocation6], %s1141
          %s1143 = sand.u32 %s98, 1
          %s1144 = smul.addr %s1143, 16
          %s1145 = scalar_lea.vmem [#allocation10], %s1144
          %1146 = dma.done %s1142, 256
        $region56: #{tpu_custom_call.1} parent=51 // pred_fallthru
          _
      $region52: #{tpu_custom_call.1} parent=5 // pred_fallthru
        _
    $region6: #{tpu_custom_call.1} parent=1 // loop_footer
      %s20 = sadd.s32 1, %s16
    $region7: #{tpu_custom_call.1} parent=1 // loop_footer_branch
      %15 = sbr.rel target = $region3
    $region8: #{tpu_custom_call.1} parent=1 // loop_exit
      _
    %1147 = vsyncpa [#allocation5], 1
    %s1148 = scalar_lea.sflag [#allocation5], 1
    %1149 = vsyncpa %s1148, 1
    %1150 = vsyncpa [#allocation8], 1
    %1151 = vsyncpa [#allocation6], 1
    %s1152 = scalar_lea.sflag [#allocation6], 1
    %1153 = vsyncpa %s1152, 1

</llo_original>
